<compile_context>
chip_gen: v7x
topology: tpu7x:2x2x1
jax: 0.10.0
libtpu: 0.0.40
codegen_flags: <defaults>
</compile_context>

<pallas_src>
import jax
import jax.numpy as jnp
from jax import lax
from jax.experimental import pallas as pl
from jax.experimental.pallas import tpu as pltpu

# ---- small, module-consistent shapes (module: hidden=300, vocab~200k,
#      ko_start=54621, n_wds=35000; scaled down, structure preserved) --------
HIDDEN    = 32
VOCAB     = 1024
KO_START  = 512
N_WDS     = 256
N_PAIRS   = 64
TOP_K     = 10          # csls_knn_10
DICO_MAX  = 20000       # mean-cosine cap

# Tile sizes (512-row / 512-col tiles: ~1-2 MB double-buffered working set per
# kernel even at real sizes -> fits v5e/v6e/v7x default scoped VMEM).
ROW_TILE  = 512         # src/tgt rows per step (map, normalize, top-K, CSLS)
COL_TILE  = 512         # sim-matrix column tile in the top-K / fused CSLS passes
PAIR_TILE = 512         # seed-dictionary pairs per gram reduction step
DICO_TILE = 512         # dictionary rows per mean-cosine step


def _round_up(n, m):
    return ((n + m - 1) // m) * m


def _pad2d(x, rows, cols):
    r, c = x.shape
    if r == rows and c == cols:
        return x
    return jnp.pad(x, ((0, rows - r), (0, cols - c)))


# ---------------------------------------------------------------------------
# Kernel 1: gram matrix  M = B^T @ A   (reduction over pair tiles,
# accumulating directly into the resident output block)
# ---------------------------------------------------------------------------
def _gram_kernel(a_ref, b_ref, m_ref):
    k = pl.program_id(0)

    @pl.when(k == 0)
    def _():
        m_ref[...] = jnp.zeros_like(m_ref)

    m_ref[...] += lax.dot_general(
        b_ref[...], a_ref[...],
        dimension_numbers=(((0,), (0,)), ((), ())),
        preferred_element_type=jnp.float32)


def gram(a, b, *, tile_pairs=PAIR_TILE):
    p, h = a.shape
    pp = _round_up(p, tile_pairs)
    a = _pad2d(a, pp, h)          # zero pair-rows contribute nothing
    b = _pad2d(b, pp, h)
    return pl.pallas_call(
        _gram_kernel,
        out_shape=jax.ShapeDtypeStruct((h, h), jnp.float32),
        grid=(pp // tile_pairs,),
        in_specs=[pl.BlockSpec((tile_pairs, h), lambda k: (k, 0)),
                  pl.BlockSpec((tile_pairs, h), lambda k: (k, 0))],
        out_specs=pl.BlockSpec((h, h), lambda k: (0, 0)),
        compiler_params=pltpu.CompilerParams(
            dimension_semantics=("arbitrary",)),
    )(a, b)


# ---------------------------------------------------------------------------
# Kernel 2: y = row_l2_normalize(x @ W^T)   (W^T pre-built in the wrapper so
# the kernel does a plain (m,k)@(k,n); rsqrt on the EUP)
# ---------------------------------------------------------------------------
def _map_norm_kernel(x_ref, wt_ref, y_ref):
    y = jnp.dot(x_ref[...], wt_ref[...], preferred_element_type=jnp.float32)
    inv = lax.rsqrt(jnp.sum(y * y, axis=1, keepdims=True) + 1e-12)
    y_ref[...] = y * inv


def map_and_normalize(x_p, wt_p, *, tile_rows=ROW_TILE):
    n, h = x_p.shape
    assert n % tile_rows == 0
    return pl.pallas_call(
        _map_norm_kernel,
        out_shape=jax.ShapeDtypeStruct((n, h), jnp.float32),
        grid=(n // tile_rows,),
        in_specs=[pl.BlockSpec((tile_rows, h), lambda i: (i, 0)),
                  pl.BlockSpec((h, h), lambda i: (0, 0))],
        out_specs=pl.BlockSpec((tile_rows, h), lambda i: (i, 0)),
        compiler_params=pltpu.CompilerParams(
            dimension_semantics=("parallel",)),
    )(x_p, wt_p)


# ---------------------------------------------------------------------------
# Kernel 3: normalize-only
# ---------------------------------------------------------------------------
def _norm_kernel(x_ref, y_ref):
    x = x_ref[...]
    inv = lax.rsqrt(jnp.sum(x * x, axis=1, keepdims=True) + 1e-12)
    y_ref[...] = x * inv


def normalize_rows(x_p, *, tile_rows=ROW_TILE):
    n, h = x_p.shape
    assert n % tile_rows == 0
    return pl.pallas_call(
        _norm_kernel,
        out_shape=jax.ShapeDtypeStruct((n, h), jnp.float32),
        grid=(n // tile_rows,),
        in_specs=[pl.BlockSpec((tile_rows, h), lambda i: (i, 0))],
        out_specs=pl.BlockSpec((tile_rows, h), lambda i: (i, 0)),
        compiler_params=pltpu.CompilerParams(
            dimension_semantics=("parallel",)),
    )(x_p)


# ---------------------------------------------------------------------------
# Kernel 4: per-row running top-K mean of (a @ bT)
#   bT is pre-transposed (h, n) bf16 so the MXU sees a plain (m,k)@(k,n).
#   Merge strategy: top-K of the fresh tile is extracted first, then merged
#   with the carried K values inside one 128-lane vreg (lanes 0..K-1 carry,
#   lanes K..2K-1 fresh); carry is stored once per step and skipped on the
#   last column tile. Tie handling is arbitrary (like torch.topk).
# ---------------------------------------------------------------------------
def _make_row_topk_kernel(n_valid_cols, tile_cols, top_k):
    def kernel(a_ref, bT_ref, r_ref, topk_ref):
        j = pl.program_id(1)
        nj = pl.num_programs(1)

        @pl.when(j == 0)
        def _():
            topk_ref[...] = jnp.full_like(topk_ref, -jnp.inf)

        # bf16 operands, f32 accumulation on the MXU.
        sim = jnp.dot(a_ref[...], bT_ref[...],
                      preferred_element_type=jnp.float32)
        # Mask padded target columns.
        col = lax.broadcasted_iota(jnp.int32, sim.shape, 1) + j * tile_cols
        sim = jnp.where(col < n_valid_cols, sim, -jnp.inf)

        rows = sim.shape[0]
        lane = lax.broadcasted_iota(jnp.int32, (rows, 128), 1)
        neg = jnp.full((rows, 128), -jnp.inf, jnp.float32)

        # 1) top-K of the fresh tile, built in registers in lanes K..2K-1.
        fresh = neg
        cur = sim
        for k in range(top_k):                       # static unroll, K=10
            m = jnp.max(cur, axis=-1, keepdims=True)
            fresh = jnp.where(lane == top_k + k, m, fresh)
            cur = jnp.where(cur == m, -jnp.inf, cur)

        # 2) single-vreg merge with the carried top-K (lanes 0..K-1).
        work = jnp.maximum(topk_ref[...], fresh)
        merged = neg
        run_sum = jnp.zeros((rows, 1), jnp.float32)
        for k in range(top_k):
            m = jnp.max(work, axis=-1, keepdims=True)
            run_sum = run_sum + m
            merged = jnp.where(lane == k, m, merged)
            work = jnp.where(work == m, -jnp.inf, work)

        @pl.when(j < nj - 1)
        def _():
            topk_ref[...] = merged                   # one full-width store

        @pl.when(j == nj - 1)
        def _():
            r_ref[...] = run_sum * (1.0 / top_k)

    return kernel


def topk_row_means(a_b16, bT_b16, n_valid_cols, *, tile_rows=ROW_TILE,
                   tile_cols=COL_TILE, top_k=TOP_K):
    na, h = a_b16.shape
    h2, nb = bT_b16.shape
    assert h == h2 and na % tile_rows == 0 and nb % tile_cols == 0
    kernel = _make_row_topk_kernel(n_valid_cols, tile_cols, top_k)
    return pl.pallas_call(
        kernel,
        out_shape=jax.ShapeDtypeStruct((na, 1), jnp.float32),
        grid=(na // tile_rows, nb // tile_cols),
        in_specs=[pl.BlockSpec((tile_rows, h), lambda i, j: (i, 0)),
                  pl.BlockSpec((h, tile_cols), lambda i, j: (0, j))],
        out_specs=pl.BlockSpec((tile_rows, 1), lambda i, j: (i, 0)),
        scratch_shapes=[pltpu.VMEM((tile_rows, 128), jnp.float32)],
        compiler_params=pltpu.CompilerParams(
            dimension_semantics=("parallel", "arbitrary")),
    )(a_b16, bT_b16)


# ---------------------------------------------------------------------------
# Kernel 5: fused CSLS + per-row top-2 (value, runner-up, argmax index).
#   csls = 2*sim - r_src - r_tgt is computed per tile and reduced on the fly;
#   the (ns, nt) csls matrix is never written to HBM. The three per-row
#   outputs are resident accumulators across the column-tile axis.
# ---------------------------------------------------------------------------
def _make_csls_top2_kernel(n_valid_cols, tile_cols):
    def kernel(a_ref, bT_ref, rs_ref, rt_ref, best_ref, sec_ref, idx_ref):
        j = pl.program_id(1)

        @pl.when(j == 0)
        def _():
            best_ref[...] = jnp.full_like(best_ref, -jnp.inf)
            sec_ref[...] = jnp.full_like(sec_ref, -jnp.inf)
            idx_ref[...] = jnp.zeros_like(idx_ref)

        sim = jnp.dot(a_ref[...], bT_ref[...],
                      preferred_element_type=jnp.float32)
        csls = 2.0 * sim - rs_ref[...] - rt_ref[...]
        # Mask padded target columns BEFORE the running max/argmax.
        col = lax.broadcasted_iota(jnp.int32, csls.shape, 1) + j * tile_cols
        csls = jnp.where(col < n_valid_cols, csls, -jnp.inf)

        big = jnp.int32(2 ** 30)
        m1 = jnp.max(csls, axis=-1, keepdims=True)
        arg1 = jnp.min(jnp.where(csls == m1, col, big), axis=-1, keepdims=True)
        m2 = jnp.max(jnp.where(col == arg1, -jnp.inf, csls),
                     axis=-1, keepdims=True)

        b0 = best_ref[...]
        s0 = sec_ref[...]
        i0 = idx_ref[...]
        # Merge tile-local (m1 >= m2) with running (b0 >= s0).
        best_ref[...] = jnp.maximum(b0, m1)
        sec_ref[...] = jnp.maximum(jnp.minimum(b0, m1), jnp.maximum(s0, m2))
        idx_ref[...] = jnp.where(m1 > b0, arg1, i0)   # keep earliest on ties

    return kernel


def csls_top2(src_b16, tgtT_b16, r_src, r_tgt_row, n_valid_cols, *,
              tile_rows=ROW_TILE, tile_cols=COL_TILE):
    ns, h = src_b16.shape
    h2, nt = tgtT_b16.shape
    assert h == h2 and ns % tile_rows == 0 and nt % tile_cols == 0
    kernel = _make_csls_top2_kernel(n_valid_cols, tile_cols)
    return pl.pallas_call(
        kernel,
        out_shape=(jax.ShapeDtypeStruct((ns, 1), jnp.float32),
                   jax.ShapeDtypeStruct((ns, 1), jnp.float32),
                   jax.ShapeDtypeStruct((ns, 1), jnp.int32)),
        grid=(ns // tile_rows, nt // tile_cols),
        in_specs=[pl.BlockSpec((tile_rows, h), lambda i, j: (i, 0)),
                  pl.BlockSpec((h, tile_cols), lambda i, j: (0, j)),
                  pl.BlockSpec((tile_rows, 1), lambda i, j: (i, 0)),
                  pl.BlockSpec((1, tile_cols), lambda i, j: (0, j))],
        out_specs=(pl.BlockSpec((tile_rows, 1), lambda i, j: (i, 0)),
                   pl.BlockSpec((tile_rows, 1), lambda i, j: (i, 0)),
                   pl.BlockSpec((tile_rows, 1), lambda i, j: (i, 0))),
        compiler_params=pltpu.CompilerParams(
            dimension_semantics=("parallel", "arbitrary")),
    )(src_b16, tgtT_b16, r_src, r_tgt_row)


# ---------------------------------------------------------------------------
# Kernel 6: mean cosine = mean_i( sum_d a[i,d]*b[i,d] ).  Per-tile work is a
# pure element-wise FMA into a VMEM partial; the full reduce + SMEM store
# happens only on the last grid step.
# ---------------------------------------------------------------------------
def _make_mean_cos_kernel(n_valid):
    inv_n = 1.0 / float(n_valid)

    def kernel(a_ref, b_ref, out_ref, acc_ref):
        i = pl.program_id(0)

        @pl.when(i == 0)
        def _():
            acc_ref[...] = jnp.zeros_like(acc_ref)

        acc_ref[...] += a_ref[...] * b_ref[...]

        @pl.when(i == pl.num_programs(0) - 1)
        def _():
            out_ref[0, 0] = jnp.sum(acc_ref[...]) * jnp.float32(inv_n)

    return kernel


def mean_cosine(a_p, b_p, n_valid, *, tile_rows=DICO_TILE):
    n, h = a_p.shape               # padded rows are zero -> contribute nothing
    assert n % tile_rows == 0
    out = pl.pallas_call(
        _make_mean_cos_kernel(n_valid),
        out_shape=jax.ShapeDtypeStruct((1, 1), jnp.float32),
        grid=(n // tile_rows,),
        in_specs=[pl.BlockSpec((tile_rows, h), lambda i: (i, 0)),
                  pl.BlockSpec((tile_rows, h), lambda i: (i, 0))],
        out_specs=pl.BlockSpec(memory_space=pltpu.MemorySpace.SMEM),
        scratch_shapes=[pltpu.VMEM((tile_rows, h), jnp.float32)],
        compiler_params=pltpu.CompilerParams(
            dimension_semantics=("arbitrary",)),
    )(a_p, b_p)
    return out[0, 0]


# ---------------------------------------------------------------------------
# Glue: the full forward pass of `Net`
# ---------------------------------------------------------------------------
def net_forward(emb, dico_pairs, slang="en"):
    """emb: (VOCAB, HIDDEN) f32; dico_pairs: (N_PAIRS, 2) int32 vocab indices."""
    h = emb.shape[1]
    hp = _round_up(h, 128)
    # Zero-pad hidden to lane width; zero padding keeps dot products & norms exact.
    emb_p = jnp.pad(emb, ((0, 0), (0, hp - h)))

    # ---- procrustes ------------------------------------------------------
    A = jnp.take(emb_p, dico_pairs[:, 0], axis=0)          # gather (glue)
    B = jnp.take(emb_p, dico_pairs[:, 1], axis=0)
    M = gram(A, B)[:h, :h]                                  # Pallas: tiled B^T @ A
    # TODO(synk): SVD has no Pallas equivalent; done in plain JAX (XLA).
    U, _, Vt = jnp.linalg.svd(M, full_matrices=True)
    W = U @ Vt                                              # tiny HxH glue matmul
    # nn.Linear applies x @ W^T: pre-transpose once so the kernel is (m,k)@(k,n).
    Wt_p = jnp.zeros((hp, hp), jnp.float32).at[:h, :h].set(W.T)

    # ---- dist_mean_cosine ------------------------------------------------
    if slang == "en":
        src_raw = emb_p[:N_WDS]
        tgt_raw = emb_p[KO_START:KO_START + N_WDS]
    else:
        src_raw = emb_p[KO_START:KO_START + N_WDS]
        tgt_raw = emb_p[:N_WDS]

    n_src, n_tgt = src_raw.shape[0], tgt_raw.shape[0]
    ns_p = _round_up(_round_up(n_src, ROW_TILE), COL_TILE)
    nt_p = _round_up(_round_up(n_tgt, ROW_TILE), COL_TILE)
    src_raw_p = _pad2d(src_raw, ns_p, hp)
    tgt_raw_p = _pad2d(tgt_raw, nt_p, hp)

    src_n = map_and_normalize(src_raw_p, Wt_p)   # Pallas: x @ W^T + rsqrt norm
    tgt_n = normalize_rows(tgt_raw_p)            # Pallas: normalize only

    # bf16 operands feed the MXU in the CSLS kernels (f32 accumulation).
    src_b = src_n.astype(jnp.bfloat16)
    tgt_b = tgt_n.astype(jnp.bfloat16)
    # One-time wrapper transposes -> no per-tile rhs transpose on the XLU.
    src_bT = src_b.T                             # (hp, ns_p)
    tgt_bT = tgt_b.T                             # (hp, nt_p)

    r_src = topk_row_means(src_b, tgt_bT, n_tgt)             # (ns_p, 1)
    r_tgt = topk_row_means(tgt_b, src_bT, n_src)             # (nt_p, 1)
    r_tgt_row = r_tgt.reshape(1, nt_p)                       # tiny glue reshape

    # Fused CSLS + per-row top-2 (no (ns, nt) matrix, no XLA top_k).
    best, second, bidx = csls_top2(src_b, tgt_bT, r_src, r_tgt_row, n_tgt)
    best = best[:n_src, 0]
    second = second[:n_src, 0]
    bidx = bidx[:n_src, 0]

    # get_candidates / build_dictionary (S2T) -- sort by top1-top2 gap (glue)
    src_ids = jnp.arange(n_src, dtype=jnp.int32)
    order = jnp.argsort(-(best - second))
    dico = jnp.stack([src_ids[order], bidx[order]], axis=1)  # (n_src, 2)
    scores = best[order]

    # mean cosine over (at most) DICO_MAX dictionary pairs
    d = dico[:DICO_MAX]
    n_d = d.shape[0]
    a = jnp.take(src_n[:n_src], d[:, 0], axis=0)
    b = jnp.take(tgt_n[:n_tgt], d[:, 1], axis=0)
    nd_p = _round_up(n_d, DICO_TILE)
    mc = mean_cosine(_pad2d(a, nd_p, hp), _pad2d(b, nd_p, hp), n_d)

    return W, mc, dico, scores


# ---------------------------------------------------------------------------
if __name__ == "__main__":
    key = jax.random.PRNGKey(0)
    k_emb, k_src, k_tgt = jax.random.split(key, 3)

    # deterministic synthetic embedding table (stand-in for embedding.vocabs)
    emb = jax.random.normal(k_emb, (VOCAB, HIDDEN), dtype=jnp.float32)

    # deterministic synthetic seed dictionary: (src word id, tgt word id)
    src_idx = jax.random.randint(k_src, (N_PAIRS,), 0, KO_START, dtype=jnp.int32)
    tgt_idx = jax.random.randint(k_tgt, (N_PAIRS,), KO_START, VOCAB, dtype=jnp.int32)
    dico_pairs = jnp.stack([src_idx, tgt_idx], axis=1)

    W, mc, dico, scores = net_forward(emb, dico_pairs, slang="en")
    jax.block_until_ready((W, mc, dico, scores))
    print("KERNEL_OK")
</pallas_src>

<mosaic_0001>
module attributes {stable_mosaic.version = 11 : i64} {
  func.func @_gram_kernel(%arg0: i32, %arg1: memref<512x128xf32, #tpu.memory_space<vmem>>, %arg2: memref<512x128xf32, #tpu.memory_space<vmem>>, %arg3: memref<128x128xf32, #tpu.memory_space<vmem>>) attributes {dimension_semantics = [#tpu.dimension_semantics<arbitrary>], iteration_bounds = array<i64: 1>, scalar_prefetch = 0 : i64, scratch_operands = 0 : i64, tpu.core_type = #tpu.core_type<tc>, window_params = [{transform_indices = @transform_0, window_bounds = array<i64: 512, 128>}, {transform_indices = @transform_1, window_bounds = array<i64: 512, 128>}, {pipeline_mode = #tpu.pipeline_mode<synchronous>, transform_indices = @transform_2, window_bounds = array<i64: 128, 128>}]} {
    %c0_i32 = arith.constant 0 : i32
    %0 = arith.cmpi eq, %arg0, %c0_i32 : i32
    %1 = arith.extui %0 : i1 to i32
    %c0_i32_0 = arith.constant 0 : i32
    %2 = arith.cmpi ne, %1, %c0_i32_0 : i32
    scf.if %2 {
      %cst_8 = arith.constant 0.000000e+00 : f32
      %9 = vector.broadcast %cst_8 : f32 to vector<128x128xf32>
      %c0_9 = arith.constant 0 : index
      %c0_10 = arith.constant 0 : index
      %10 = vector.load %arg3[%c0_9, %c0_10] : memref<128x128xf32, #tpu.memory_space<vmem>>, vector<128x128xf32>
      tpu.vector_store %arg3[%c0_9, %c0_10], %9 {strides = array<i32>} : memref<128x128xf32, #tpu.memory_space<vmem>>, vector<128x128xf32>,
    } else {
    }
    %c0 = arith.constant 0 : index
    %c0_1 = arith.constant 0 : index
    %3 = vector.load %arg3[%c0, %c0_1] : memref<128x128xf32, #tpu.memory_space<vmem>>, vector<128x128xf32>
    %c0_2 = arith.constant 0 : index
    %c0_3 = arith.constant 0 : index
    %4 = vector.load %arg2[%c0_2, %c0_3] : memref<512x128xf32, #tpu.memory_space<vmem>>, vector<512x128xf32>
    %c0_4 = arith.constant 0 : index
    %c0_5 = arith.constant 0 : index
    %5 = vector.load %arg1[%c0_4, %c0_5] : memref<512x128xf32, #tpu.memory_space<vmem>>, vector<512x128xf32>
    %cst = arith.constant dense<0.000000e+00> : vector<128x128xf32>
    %6 = tpu.matmul %4, %5, %cst {dimension_numbers = #tpu.dot_dimension_numbers<[0], [0], [1], [1], [0, 1, 1, 1], [], []>} : vector<512x128xf32>, vector<512x128xf32>, vector<128x128xf32> -> vector<128x128xf32>
    %7 = arith.addf %3, %6 : vector<128x128xf32>
    %c0_6 = arith.constant 0 : index
    %c0_7 = arith.constant 0 : index
    %8 = vector.load %arg3[%c0_6, %c0_7] : memref<128x128xf32, #tpu.memory_space<vmem>>, vector<128x128xf32>
    tpu.vector_store %arg3[%c0_6, %c0_7], %7 {strides = array<i32>} : memref<128x128xf32, #tpu.memory_space<vmem>>, vector<128x128xf32>,
    return
  }
  func.func @transform_0(%arg0: i32) -> (i32, i32) {
    %c0_i32 = arith.constant 0 : i32
    %c0_i32_0 = arith.constant 0 : i32
    return %arg0, %c0_i32 : i32, i32
  }
  func.func @transform_1(%arg0: i32) -> (i32, i32) {
    %c0_i32 = arith.constant 0 : i32
    %c0_i32_0 = arith.constant 0 : i32
    return %arg0, %c0_i32 : i32, i32
  }
  func.func @transform_2(%arg0: i32) -> (i32, i32) {
    %c0_i32 = arith.constant 0 : i32
    %c0_i32_0 = arith.constant 0 : i32
    %c0_i32_1 = arith.constant 0 : i32
    return %c0_i32, %c0_i32_0 : i32, i32
  }
}

</mosaic_0001>

<llo_original>
// kernel: tpu_custom_call.1
$region0: #{tpu_custom_call.1}
  #allocation0 [shape = 'u32[]', space=smem, size = 0x4, offset = 0x4, fixed_abs, tag = 'smem constant byte address 0x4 - core index']
  #allocation1 [shape = 'u32[144,128]{1,0:T(1,128)}', space=vmem, size = 0x12000, scoped, tag = 'internal scratch']
  %s0 = inlined_call_operand.hbm [shape: f32[512,128], index: 0, kind: input, shape index: {}]
  %s1 = inlined_call_operand.hbm [shape: f32[512,128], index: 1, kind: input, shape index: {}]
  %s2 = inlined_call_operand.hbm [shape: f32[128,128], index: 2, kind: output, shape index: {}]
  %s3 = sld [smem:[#allocation0]]
  $region30: #{tpu_custom_call.1} parent=0
    _
  %s5 = ssub.s32 1, %s3
  %s6 = scalar_select 0, %s5, %s3
  $region1: #{tpu_custom_call.1} parent=0
    #allocation2 [shape = 'u8[262144]{0}', space=vmem, size = 0x40000, scoped, tag = 'input window, operand 0, single buffered']
    #allocation3 [shape = 's32[1]{0}', space=sflag, size = 0x4, scoped, tag = 'scoped memory for tpu_custom_call.1']
    #allocation4 [shape = 's32[1]{0}', space=sflag, size = 0x4, scoped, tag = 'scoped memory for tpu_custom_call.1']
    #allocation5 [shape = 'u8[262144]{0}', space=vmem, size = 0x40000, scoped, tag = 'input window, operand 1, single buffered']
    #allocation6 [shape = 's32[1]{0}', space=sflag, size = 0x4, scoped, tag = 'scoped memory for tpu_custom_call.1']
    #allocation7 [shape = 'u8[65536]{0}', space=vmem, size = 0x10000, scoped, tag = 'output window, operand 0, single buffered']
    %7 = vsyncpa [#allocation3], 0
    %8 = vsyncpa [#allocation6], 0
    %9 = vsyncpa [#allocation4], 0
    // Predicated region
    $region2: #{tpu_custom_call.1} parent=1 // pred_check
      _
    $region3: #{tpu_custom_call.1} parent=1 // pred_check_branch
      %11 = sbr.rel (0) target = $region5
    $region4: #{tpu_custom_call.1} parent=1 // pred_region
      %s13 = ssub.s32 8192, 8192
      %14 = vsyncadd [#allocation3], %s13
      %s15 = sshll.u32 [#allocation2], 4
      %s16 = int_to_ptr.vmem [resolvable:$true] %s15
      %21 = dma.hbm_to_vmem [thread:$0]  %s0, 8192, %s16, [#allocation3], 128, 128, 8
    $region5: #{tpu_custom_call.1} parent=1 // pred_fallthru
      _
    // Predicated region
    $region6: #{tpu_custom_call.1} parent=1 // pred_check
      _
    $region7: #{tpu_custom_call.1} parent=1 // pred_check_branch
      %23 = sbr.rel (0) target = $region9
    $region8: #{tpu_custom_call.1} parent=1 // pred_region
      %s25 = ssub.s32 8192, 8192
      %26 = vsyncadd [#allocation6], %s25
      %s27 = sshll.u32 [#allocation5], 4
      %s28 = int_to_ptr.vmem [resolvable:$true] %s27
      %33 = dma.hbm_to_vmem [thread:$0]  %s1, 8192, %s28, [#allocation6], 128, 128, 8
    $region9: #{tpu_custom_call.1} parent=1 // pred_fallthru
      _
    // Predicated region
    $region10: #{tpu_custom_call.1} parent=1 // pred_check
      _
    $region11: #{tpu_custom_call.1} parent=1 // pred_check_branch
      %35 = sbr.rel (0) target = $region13
    $region12: #{tpu_custom_call.1} parent=1 // pred_region
      %36 = dma.done [#allocation3], 8192
    $region13: #{tpu_custom_call.1} parent=1 // pred_fallthru
      _
    // Predicated region
    $region14: #{tpu_custom_call.1} parent=1 // pred_check
      _
    $region15: #{tpu_custom_call.1} parent=1 // pred_check_branch
      %38 = sbr.rel (0) target = $region17
    $region16: #{tpu_custom_call.1} parent=1 // pred_region
      %39 = dma.done [#allocation6], 8192
    $region17: #{tpu_custom_call.1} parent=1 // pred_fallthru
      _
    %p40 = scmp.eq.s32.totalorder 0, 0
    // Predicated region
    $region18: #{tpu_custom_call.1} parent=1 // pred_check
      %p41 = pneg %p40
    $region19: #{tpu_custom_call.1} parent=1 // pred_check_branch
      %43 = sbr.rel (%p41) target = $region21
    $region20: #{tpu_custom_call.1} parent=1 // pred_region
      %44 = vst [vmem:[#allocation7] sm:$0xff] 0.0
      %45 = vst [vmem:[#allocation7 + $0x8] sm:$0xff] 0.0
      %46 = vst [vmem:[#allocation7 + $0x10] sm:$0xff] 0.0
      %47 = vst [vmem:[#allocation7 + $0x18] sm:$0xff] 0.0
      %48 = vst [vmem:[#allocation7 + $0x20] sm:$0xff] 0.0
      %49 = vst [vmem:[#allocation7 + $0x28] sm:$0xff] 0.0
      %50 = vst [vmem:[#allocation7 + $0x30] sm:$0xff] 0.0
      %51 = vst [vmem:[#allocation7 + $0x38] sm:$0xff] 0.0
      %52 = vst [vmem:[#allocation7 + $0x40] sm:$0xff] 0.0
      %53 = vst [vmem:[#allocation7 + $0x48] sm:$0xff] 0.0
      %54 = vst [vmem:[#allocation7 + $0x50] sm:$0xff] 0.0
      %55 = vst [vmem:[#allocation7 + $0x58] sm:$0xff] 0.0
      %56 = vst [vmem:[#allocation7 + $0x60] sm:$0xff] 0.0
      %57 = vst [vmem:[#allocation7 + $0x68] sm:$0xff] 0.0
      %58 = vst [vmem:[#allocation7 + $0x70] sm:$0xff] 0.0
      %59 = vst [vmem:[#allocation7 + $0x78] sm:$0xff] 0.0
    $region21: #{tpu_custom_call.1} parent=1 // pred_fallthru
      _
    %v60 = vld [vmem:[#allocation7] sm:$0xff]
    %v61 = vld [vmem:[#allocation7 + $0x8] sm:$0xff]
    %v62 = vld [vmem:[#allocation7 + $0x10] sm:$0xff]
    %v63 = vld [vmem:[#allocation7 + $0x18] sm:$0xff]
    %v64 = vld [vmem:[#allocation7 + $0x20] sm:$0xff]
    %v65 = vld [vmem:[#allocation7 + $0x28] sm:$0xff]
    %v66 = vld [vmem:[#allocation7 + $0x30] sm:$0xff]
    %v67 = vld [vmem:[#allocation7 + $0x38] sm:$0xff]
    %v68 = vld [vmem:[#allocation7 + $0x40] sm:$0xff]
    %v69 = vld [vmem:[#allocation7 + $0x48] sm:$0xff]
    %v70 = vld [vmem:[#allocation7 + $0x50] sm:$0xff]
    %v71 = vld [vmem:[#allocation7 + $0x58] sm:$0xff]
    %v72 = vld [vmem:[#allocation7 + $0x60] sm:$0xff]
    %v73 = vld [vmem:[#allocation7 + $0x68] sm:$0xff]
    %v74 = vld [vmem:[#allocation7 + $0x70] sm:$0xff]
    %v75 = vld [vmem:[#allocation7 + $0x78] sm:$0xff]
    %v76 = vld [vmem:[#allocation5] sm:$0xff]
    %v77 = vld [vmem:[#allocation5 + $0x8] sm:$0xff]
    %v78 = vld [vmem:[#allocation5 + $0x10] sm:$0xff]
    %v79 = vld [vmem:[#allocation5 + $0x18] sm:$0xff]
    %v80 = vld [vmem:[#allocation5 + $0x20] sm:$0xff]
    %v81 = vld [vmem:[#allocation5 + $0x28] sm:$0xff]
    %v82 = vld [vmem:[#allocation5 + $0x30] sm:$0xff]
    %v83 = vld [vmem:[#allocation5 + $0x38] sm:$0xff]
    %v84 = vld [vmem:[#allocation5 + $0x40] sm:$0xff]
    %v85 = vld [vmem:[#allocation5 + $0x48] sm:$0xff]
    %v86 = vld [vmem:[#allocation5 + $0x50] sm:$0xff]
    %v87 = vld [vmem:[#allocation5 + $0x58] sm:$0xff]
    %v88 = vld [vmem:[#allocation5 + $0x60] sm:$0xff]
    %v89 = vld [vmem:[#allocation5 + $0x68] sm:$0xff]
    %v90 = vld [vmem:[#allocation5 + $0x70] sm:$0xff]
    %v91 = vld [vmem:[#allocation5 + $0x78] sm:$0xff]
    %v92 = vld [vmem:[#allocation5 + $0x80] sm:$0xff]
    %v93 = vld [vmem:[#allocation5 + $0x88] sm:$0xff]
    %v94 = vld [vmem:[#allocation5 + $0x90] sm:$0xff]
    %v95 = vld [vmem:[#allocation5 + $0x98] sm:$0xff]
    %v96 = vld [vmem:[#allocation5 + $0xa0] sm:$0xff]
    %v97 = vld [vmem:[#allocation5 + $0xa8] sm:$0xff]
    %v98 = vld [vmem:[#allocation5 + $0xb0] sm:$0xff]
    %v99 = vld [vmem:[#allocation5 + $0xb8] sm:$0xff]
    %v100 = vld [vmem:[#allocation5 + $0xc0] sm:$0xff]
    %v101 = vld [vmem:[#allocation5 + $0xc8] sm:$0xff]
    %v102 = vld [vmem:[#allocation5 + $0xd0] sm:$0xff]
    %v103 = vld [vmem:[#allocation5 + $0xd8] sm:$0xff]
    %v104 = vld [vmem:[#allocation5 + $0xe0] sm:$0xff]
    %v105 = vld [vmem:[#allocation5 + $0xe8] sm:$0xff]
    %v106 = vld [vmem:[#allocation5 + $0xf0] sm:$0xff]
    %v107 = vld [vmem:[#allocation5 + $0xf8] sm:$0xff]
    %v108 = vld [vmem:[#allocation5 + $0x100] sm:$0xff]
    %v109 = vld [vmem:[#allocation5 + $0x108] sm:$0xff]
    %v110 = vld [vmem:[#allocation5 + $0x110] sm:$0xff]
    %v111 = vld [vmem:[#allocation5 + $0x118] sm:$0xff]
    %v112 = vld [vmem:[#allocation5 + $0x120] sm:$0xff]
    %v113 = vld [vmem:[#allocation5 + $0x128] sm:$0xff]
    %v114 = vld [vmem:[#allocation5 + $0x130] sm:$0xff]
    %v115 = vld [vmem:[#allocation5 + $0x138] sm:$0xff]
    %v116 = vld [vmem:[#allocation5 + $0x140] sm:$0xff]
    %v117 = vld [vmem:[#allocation5 + $0x148] sm:$0xff]
    %v118 = vld [vmem:[#allocation5 + $0x150] sm:$0xff]
    %v119 = vld [vmem:[#allocation5 + $0x158] sm:$0xff]
    %v120 = vld [vmem:[#allocation5 + $0x160] sm:$0xff]
    %v121 = vld [vmem:[#allocation5 + $0x168] sm:$0xff]
    %v122 = vld [vmem:[#allocation5 + $0x170] sm:$0xff]
    %v123 = vld [vmem:[#allocation5 + $0x178] sm:$0xff]
    %v124 = vld [vmem:[#allocation5 + $0x180] sm:$0xff]
    %v125 = vld [vmem:[#allocation5 + $0x188] sm:$0xff]
    %v126 = vld [vmem:[#allocation5 + $0x190] sm:$0xff]
    %v127 = vld [vmem:[#allocation5 + $0x198] sm:$0xff]
    %v128 = vld [vmem:[#allocation5 + $0x1a0] sm:$0xff]
    %v129 = vld [vmem:[#allocation5 + $0x1a8] sm:$0xff]
    %v130 = vld [vmem:[#allocation5 + $0x1b0] sm:$0xff]
    %v131 = vld [vmem:[#allocation5 + $0x1b8] sm:$0xff]
    %v132 = vld [vmem:[#allocation5 + $0x1c0] sm:$0xff]
    %v133 = vld [vmem:[#allocation5 + $0x1c8] sm:$0xff]
    %v134 = vld [vmem:[#allocation5 + $0x1d0] sm:$0xff]
    %v135 = vld [vmem:[#allocation5 + $0x1d8] sm:$0xff]
    %v136 = vld [vmem:[#allocation5 + $0x1e0] sm:$0xff]
    %v137 = vld [vmem:[#allocation5 + $0x1e8] sm:$0xff]
    %v138 = vld [vmem:[#allocation5 + $0x1f0] sm:$0xff]
    %v139 = vld [vmem:[#allocation5 + $0x1f8] sm:$0xff]
    %v140 = vld [vmem:[#allocation2] sm:$0xff]
    %v141 = vld [vmem:[#allocation2 + $0x8] sm:$0xff]
    %v142 = vld [vmem:[#allocation2 + $0x10] sm:$0xff]
    %v143 = vld [vmem:[#allocation2 + $0x18] sm:$0xff]
    %v144 = vld [vmem:[#allocation2 + $0x20] sm:$0xff]
    %v145 = vld [vmem:[#allocation2 + $0x28] sm:$0xff]
    %v146 = vld [vmem:[#allocation2 + $0x30] sm:$0xff]
    %v147 = vld [vmem:[#allocation2 + $0x38] sm:$0xff]
    %v148 = vld [vmem:[#allocation2 + $0x40] sm:$0xff]
    %v149 = vld [vmem:[#allocation2 + $0x48] sm:$0xff]
    %v150 = vld [vmem:[#allocation2 + $0x50] sm:$0xff]
    %v151 = vld [vmem:[#allocation2 + $0x58] sm:$0xff]
    %v152 = vld [vmem:[#allocation2 + $0x60] sm:$0xff]
    %v153 = vld [vmem:[#allocation2 + $0x68] sm:$0xff]
    %v154 = vld [vmem:[#allocation2 + $0x70] sm:$0xff]
    %v155 = vld [vmem:[#allocation2 + $0x78] sm:$0xff]
    %v156 = vld [vmem:[#allocation2 + $0x80] sm:$0xff]
    %v157 = vld [vmem:[#allocation2 + $0x88] sm:$0xff]
    %v158 = vld [vmem:[#allocation2 + $0x90] sm:$0xff]
    %v159 = vld [vmem:[#allocation2 + $0x98] sm:$0xff]
    %v160 = vld [vmem:[#allocation2 + $0xa0] sm:$0xff]
    %v161 = vld [vmem:[#allocation2 + $0xa8] sm:$0xff]
    %v162 = vld [vmem:[#allocation2 + $0xb0] sm:$0xff]
    %v163 = vld [vmem:[#allocation2 + $0xb8] sm:$0xff]
    %v164 = vld [vmem:[#allocation2 + $0xc0] sm:$0xff]
    %v165 = vld [vmem:[#allocation2 + $0xc8] sm:$0xff]
    %v166 = vld [vmem:[#allocation2 + $0xd0] sm:$0xff]
    %v167 = vld [vmem:[#allocation2 + $0xd8] sm:$0xff]
    %v168 = vld [vmem:[#allocation2 + $0xe0] sm:$0xff]
    %v169 = vld [vmem:[#allocation2 + $0xe8] sm:$0xff]
    %v170 = vld [vmem:[#allocation2 + $0xf0] sm:$0xff]
    %v171 = vld [vmem:[#allocation2 + $0xf8] sm:$0xff]
    %v172 = vld [vmem:[#allocation2 + $0x100] sm:$0xff]
    %v173 = vld [vmem:[#allocation2 + $0x108] sm:$0xff]
    %v174 = vld [vmem:[#allocation2 + $0x110] sm:$0xff]
    %v175 = vld [vmem:[#allocation2 + $0x118] sm:$0xff]
    %v176 = vld [vmem:[#allocation2 + $0x120] sm:$0xff]
    %v177 = vld [vmem:[#allocation2 + $0x128] sm:$0xff]
    %v178 = vld [vmem:[#allocation2 + $0x130] sm:$0xff]
    %v179 = vld [vmem:[#allocation2 + $0x138] sm:$0xff]
    %v180 = vld [vmem:[#allocation2 + $0x140] sm:$0xff]
    %v181 = vld [vmem:[#allocation2 + $0x148] sm:$0xff]
    %v182 = vld [vmem:[#allocation2 + $0x150] sm:$0xff]
    %v183 = vld [vmem:[#allocation2 + $0x158] sm:$0xff]
    %v184 = vld [vmem:[#allocation2 + $0x160] sm:$0xff]
    %v185 = vld [vmem:[#allocation2 + $0x168] sm:$0xff]
    %v186 = vld [vmem:[#allocation2 + $0x170] sm:$0xff]
    %v187 = vld [vmem:[#allocation2 + $0x178] sm:$0xff]
    %v188 = vld [vmem:[#allocation2 + $0x180] sm:$0xff]
    %v189 = vld [vmem:[#allocation2 + $0x188] sm:$0xff]
    %v190 = vld [vmem:[#allocation2 + $0x190] sm:$0xff]
    %v191 = vld [vmem:[#allocation2 + $0x198] sm:$0xff]
    %v192 = vld [vmem:[#allocation2 + $0x1a0] sm:$0xff]
    %v193 = vld [vmem:[#allocation2 + $0x1a8] sm:$0xff]
    %v194 = vld [vmem:[#allocation2 + $0x1b0] sm:$0xff]
    %v195 = vld [vmem:[#allocation2 + $0x1b8] sm:$0xff]
    %v196 = vld [vmem:[#allocation2 + $0x1c0] sm:$0xff]
    %v197 = vld [vmem:[#allocation2 + $0x1c8] sm:$0xff]
    %v198 = vld [vmem:[#allocation2 + $0x1d0] sm:$0xff]
    %v199 = vld [vmem:[#allocation2 + $0x1d8] sm:$0xff]
    %v200 = vld [vmem:[#allocation2 + $0x1e0] sm:$0xff]
    %v201 = vld [vmem:[#allocation2 + $0x1e8] sm:$0xff]
    %v202 = vld [vmem:[#allocation2 + $0x1f0] sm:$0xff]
    %v203 = vld [vmem:[#allocation2 + $0x1f8] sm:$0xff]
    %204 = vxpose.xlu0.b32.start [1/16] %v76, 128
    %205 = vxpose.xlu0.b32.cont [2/16] %v77, 128
    %206 = vxpose.xlu0.b32.cont [3/16] %v78, 128
    %207 = vxpose.xlu0.b32.cont [4/16] %v79, 128
    %208 = vxpose.xlu0.b32.cont [5/16] %v80, 128
    %209 = vxpose.xlu0.b32.cont [6/16] %v81, 128
    %210 = vxpose.xlu0.b32.cont [7/16] %v82, 128
    %211 = vxpose.xlu0.b32.cont [8/16] %v83, 128
    %212 = vxpose.xlu0.b32.cont [9/16] %v84, 128
    %213 = vxpose.xlu0.b32.cont [10/16] %v85, 128
    %214 = vxpose.xlu0.b32.cont [11/16] %v86, 128
    %215 = vxpose.xlu0.b32.cont [12/16] %v87, 128
    %216 = vxpose.xlu0.b32.cont [13/16] %v88, 128
    %217 = vxpose.xlu0.b32.cont [14/16] %v89, 128
    %218 = vxpose.xlu0.b32.cont [15/16] %v90, 128
    %219 = vxpose.xlu0.b32.end [16/16] %v91, 128
    %v220 = vpop.trf.xlu0
    %v221 = vpop.trf.xlu0
    %v222 = vpop.trf.xlu0
    %v223 = vpop.trf.xlu0
    %v224 = vpop.trf.xlu0
    %v225 = vpop.trf.xlu0
    %v226 = vpop.trf.xlu0
    %v227 = vpop.trf.xlu0
    %v228 = vpop.trf.xlu0
    %v229 = vpop.trf.xlu0
    %v230 = vpop.trf.xlu0
    %v231 = vpop.trf.xlu0
    %v232 = vpop.trf.xlu0
    %v233 = vpop.trf.xlu0
    %v234 = vpop.trf.xlu0
    %v235 = vpop.trf.xlu0
    %236 = vxpose.xlu0.b32.start [1/16] %v92, 128
    %237 = vxpose.xlu0.b32.cont [2/16] %v93, 128
    %238 = vxpose.xlu0.b32.cont [3/16] %v94, 128
    %239 = vxpose.xlu0.b32.cont [4/16] %v95, 128
    %240 = vxpose.xlu0.b32.cont [5/16] %v96, 128
    %241 = vxpose.xlu0.b32.cont [6/16] %v97, 128
    %242 = vxpose.xlu0.b32.cont [7/16] %v98, 128
    %243 = vxpose.xlu0.b32.cont [8/16] %v99, 128
    %244 = vxpose.xlu0.b32.cont [9/16] %v100, 128
    %245 = vxpose.xlu0.b32.cont [10/16] %v101, 128
    %246 = vxpose.xlu0.b32.cont [11/16] %v102, 128
    %247 = vxpose.xlu0.b32.cont [12/16] %v103, 128
    %248 = vxpose.xlu0.b32.cont [13/16] %v104, 128
    %249 = vxpose.xlu0.b32.cont [14/16] %v105, 128
    %250 = vxpose.xlu0.b32.cont [15/16] %v106, 128
    %251 = vxpose.xlu0.b32.end [16/16] %v107, 128
    %v252 = vpop.trf.xlu0
    %v253 = vpop.trf.xlu0
    %v254 = vpop.trf.xlu0
    %v255 = vpop.trf.xlu0
    %v256 = vpop.trf.xlu0
    %v257 = vpop.trf.xlu0
    %v258 = vpop.trf.xlu0
    %v259 = vpop.trf.xlu0
    %v260 = vpop.trf.xlu0
    %v261 = vpop.trf.xlu0
    %v262 = vpop.trf.xlu0
    %v263 = vpop.trf.xlu0
    %v264 = vpop.trf.xlu0
    %v265 = vpop.trf.xlu0
    %v266 = vpop.trf.xlu0
    %v267 = vpop.trf.xlu0
    %268 = vxpose.xlu0.b32.start [1/16] %v108, 128
    %269 = vxpose.xlu0.b32.cont [2/16] %v109, 128
    %270 = vxpose.xlu0.b32.cont [3/16] %v110, 128
    %271 = vxpose.xlu0.b32.cont [4/16] %v111, 128
    %272 = vxpose.xlu0.b32.cont [5/16] %v112, 128
    %273 = vxpose.xlu0.b32.cont [6/16] %v113, 128
    %274 = vxpose.xlu0.b32.cont [7/16] %v114, 128
    %275 = vxpose.xlu0.b32.cont [8/16] %v115, 128
    %276 = vxpose.xlu0.b32.cont [9/16] %v116, 128
    %277 = vxpose.xlu0.b32.cont [10/16] %v117, 128
    %278 = vxpose.xlu0.b32.cont [11/16] %v118, 128
    %279 = vxpose.xlu0.b32.cont [12/16] %v119, 128
    %280 = vxpose.xlu0.b32.cont [13/16] %v120, 128
    %281 = vxpose.xlu0.b32.cont [14/16] %v121, 128
    %282 = vxpose.xlu0.b32.cont [15/16] %v122, 128
    %283 = vxpose.xlu0.b32.end [16/16] %v123, 128
    %v284 = vpop.trf.xlu0
    %v285 = vpop.trf.xlu0
    %v286 = vpop.trf.xlu0
    %v287 = vpop.trf.xlu0
    %v288 = vpop.trf.xlu0
    %v289 = vpop.trf.xlu0
    %v290 = vpop.trf.xlu0
    %v291 = vpop.trf.xlu0
    %v292 = vpop.trf.xlu0
    %v293 = vpop.trf.xlu0
    %v294 = vpop.trf.xlu0
    %v295 = vpop.trf.xlu0
    %v296 = vpop.trf.xlu0
    %v297 = vpop.trf.xlu0
    %v298 = vpop.trf.xlu0
    %v299 = vpop.trf.xlu0
    %300 = vxpose.xlu0.b32.start [1/16] %v124, 128
    %301 = vxpose.xlu0.b32.cont [2/16] %v125, 128
    %302 = vxpose.xlu0.b32.cont [3/16] %v126, 128
    %303 = vxpose.xlu0.b32.cont [4/16] %v127, 128
    %304 = vxpose.xlu0.b32.cont [5/16] %v128, 128
    %305 = vxpose.xlu0.b32.cont [6/16] %v129, 128
    %306 = vxpose.xlu0.b32.cont [7/16] %v130, 128
    %307 = vxpose.xlu0.b32.cont [8/16] %v131, 128
    %308 = vxpose.xlu0.b32.cont [9/16] %v132, 128
    %309 = vxpose.xlu0.b32.cont [10/16] %v133, 128
    %310 = vxpose.xlu0.b32.cont [11/16] %v134, 128
    %311 = vxpose.xlu0.b32.cont [12/16] %v135, 128
    %312 = vxpose.xlu0.b32.cont [13/16] %v136, 128
    %313 = vxpose.xlu0.b32.cont [14/16] %v137, 128
    %314 = vxpose.xlu0.b32.cont [15/16] %v138, 128
    %315 = vxpose.xlu0.b32.end [16/16] %v139, 128
    %v316 = vpop.trf.xlu0
    %v317 = vpop.trf.xlu0
    %v318 = vpop.trf.xlu0
    %v319 = vpop.trf.xlu0
    %v320 = vpop.trf.xlu0
    %v321 = vpop.trf.xlu0
    %v322 = vpop.trf.xlu0
    %v323 = vpop.trf.xlu0
    %v324 = vpop.trf.xlu0
    %v325 = vpop.trf.xlu0
    %v326 = vpop.trf.xlu0
    %v327 = vpop.trf.xlu0
    %v328 = vpop.trf.xlu0
    %v329 = vpop.trf.xlu0
    %v330 = vpop.trf.xlu0
    %v331 = vpop.trf.xlu0
    %332 = vmatprep.subr.mxu0 0.0
    %333 = vmatpush1.msra.mxu0 %v140
    %334 = vmatprep.subr.mxu0 0.0
    %335 = vmatpush1.msra.mxu0 %v141
    %336 = vmatprep.subr.mxu0 0.0
    %337 = vmatpush1.msra.mxu0 %v142
    %338 = vmatprep.subr.mxu0 0.0
    %339 = vmatpush1.msra.mxu0 %v143
    %340 = vmatprep.subr.mxu0 0.0
    %341 = vmatpush1.msra.mxu0 %v144
    %342 = vmatprep.subr.mxu0 0.0
    %343 = vmatpush1.msra.mxu0 %v145
    %344 = vmatprep.subr.mxu0 0.0
    %345 = vmatpush1.msra.mxu0 %v146
    %346 = vmatprep.subr.mxu0 0.0
    %347 = vmatpush1.msra.mxu0 %v147
    %348 = vmatprep.subr.mxu0 0.0
    %349 = vmatpush1.msra.mxu0 %v148
    %350 = vmatprep.subr.mxu0 0.0
    %351 = vmatpush1.msra.mxu0 %v149
    %352 = vmatprep.subr.mxu0 0.0
    %353 = vmatpush1.msra.mxu0 %v150
    %354 = vmatprep.subr.mxu0 0.0
    %355 = vmatpush1.msra.mxu0 %v151
    %356 = vmatprep.subr.mxu0 0.0
    %357 = vmatpush1.msra.mxu0 %v152
    %358 = vmatprep.subr.mxu0 0.0
    %359 = vmatpush1.msra.mxu0 %v153
    %360 = vmatprep.subr.mxu0 0.0
    %361 = vmatpush1.msra.mxu0 %v154
    %362 = vmatprep.subr.mxu0 0.0
    %363 = vmatpush1.msra.mxu0 %v155
    %364 = vmatprep.subr.mxu0 0.0
    %365 = vmatpush1.msra.mxu0 %v156
    %366 = vmatprep.subr.mxu0 0.0
    %367 = vmatpush1.msra.mxu0 %v157
    %368 = vmatprep.subr.mxu0 0.0
    %369 = vmatpush1.msra.mxu0 %v158
    %370 = vmatprep.subr.mxu0 0.0
    %371 = vmatpush1.msra.mxu0 %v159
    %372 = vmatprep.subr.mxu0 0.0
    %373 = vmatpush1.msra.mxu0 %v160
    %374 = vmatprep.subr.mxu0 0.0
    %375 = vmatpush1.msra.mxu0 %v161
    %376 = vmatprep.subr.mxu0 0.0
    %377 = vmatpush1.msra.mxu0 %v162
    %378 = vmatprep.subr.mxu0 0.0
    %379 = vmatpush1.msra.mxu0 %v163
    %380 = vmatprep.subr.mxu0 0.0
    %381 = vmatpush1.msra.mxu0 %v164
    %382 = vmatprep.subr.mxu0 0.0
    %383 = vmatpush1.msra.mxu0 %v165
    %384 = vmatprep.subr.mxu0 0.0
    %385 = vmatpush1.msra.mxu0 %v166
    %386 = vmatprep.subr.mxu0 0.0
    %387 = vmatpush1.msra.mxu0 %v167
    %388 = vmatprep.subr.mxu0 0.0
    %389 = vmatpush1.msra.mxu0 %v168
    %390 = vmatprep.subr.mxu0 0.0
    %391 = vmatpush1.msra.mxu0 %v169
    %392 = vmatprep.subr.mxu0 0.0
    %393 = vmatpush1.msra.mxu0 %v170
    %394 = vmatprep.subr.mxu0 0.0
    %395 = vmatpush1.msra.mxu0 %v171
    %396 = vmatprep.mubr.f32.mxu0 %v252
    %397 = vmatmul.mubr.f32.gmra.mrb[0].mxu0 %v220
    %v398 = vpop.f32.mrb[0].mxu0
    %v399 = vadd.f32 0.0, %v398
    %v400 = vpop.f32.mrb[0].mxu0
    %401 = vmatprep.mubr.f32.mxu0 %v253
    %402 = vmatmul.mubr.f32.gmra.mrb[0].mxu0 %v221
    %v403 = vpop.f32.mrb[0].mxu0
    %v404 = vadd.f32 0.0, %v403
    %v405 = vpop.f32.mrb[0].mxu0
    %406 = vmatprep.mubr.f32.mxu0 %v254
    %407 = vmatmul.mubr.f32.gmra.mrb[0].mxu0 %v222
    %v408 = vpop.f32.mrb[0].mxu0
    %v409 = vadd.f32 0.0, %v408
    %v410 = vpop.f32.mrb[0].mxu0
    %411 = vmatprep.mubr.f32.mxu0 %v255
    %412 = vmatmul.mubr.f32.gmra.mrb[0].mxu0 %v223
    %v413 = vpop.f32.mrb[0].mxu0
    %v414 = vadd.f32 0.0, %v413
    %v415 = vpop.f32.mrb[0].mxu0
    %416 = vmatprep.mubr.f32.mxu0 %v256
    %417 = vmatmul.mubr.f32.gmra.mrb[0].mxu0 %v224
    %v418 = vpop.f32.mrb[0].mxu0
    %v419 = vadd.f32 0.0, %v418
    %v420 = vpop.f32.mrb[0].mxu0
    %421 = vmatprep.mubr.f32.mxu0 %v257
    %422 = vmatmul.mubr.f32.gmra.mrb[0].mxu0 %v225
    %v423 = vpop.f32.mrb[0].mxu0
    %v424 = vadd.f32 0.0, %v423
    %v425 = vpop.f32.mrb[0].mxu0
    %426 = vmatprep.mubr.f32.mxu0 %v258
    %427 = vmatmul.mubr.f32.gmra.mrb[0].mxu0 %v226
    %v428 = vpop.f32.mrb[0].mxu0
    %v429 = vadd.f32 0.0, %v428
    %v430 = vpop.f32.mrb[0].mxu0
    %431 = vmatprep.mubr.f32.mxu0 %v259
    %432 = vmatmul.mubr.f32.gmra.mrb[0].mxu0 %v227
    %v433 = vpop.f32.mrb[0].mxu0
    %v434 = vadd.f32 0.0, %v433
    %v435 = vpop.f32.mrb[0].mxu0
    %436 = vmatprep.mubr.f32.mxu0 %v260
    %437 = vmatmul.mubr.f32.gmra.mrb[0].mxu0 %v228
    %v438 = vpop.f32.mrb[0].mxu0
    %v439 = vadd.f32 0.0, %v438
    %v440 = vpop.f32.mrb[0].mxu0
    %441 = vmatprep.mubr.f32.mxu0 %v261
    %442 = vmatmul.mubr.f32.gmra.mrb[0].mxu0 %v229
    %v443 = vpop.f32.mrb[0].mxu0
    %v444 = vadd.f32 0.0, %v443
    %v445 = vpop.f32.mrb[0].mxu0
    %446 = vmatprep.mubr.f32.mxu0 %v262
    %447 = vmatmul.mubr.f32.gmra.mrb[0].mxu0 %v230
    %v448 = vpop.f32.mrb[0].mxu0
    %v449 = vadd.f32 0.0, %v448
    %v450 = vpop.f32.mrb[0].mxu0
    %451 = vmatprep.mubr.f32.mxu0 %v263
    %452 = vmatmul.mubr.f32.gmra.mrb[0].mxu0 %v231
    %v453 = vpop.f32.mrb[0].mxu0
    %v454 = vadd.f32 0.0, %v453
    %v455 = vpop.f32.mrb[0].mxu0
    %456 = vmatprep.mubr.f32.mxu0 %v264
    %457 = vmatmul.mubr.f32.gmra.mrb[0].mxu0 %v232
    %v458 = vpop.f32.mrb[0].mxu0
    %v459 = vadd.f32 0.0, %v458
    %v460 = vpop.f32.mrb[0].mxu0
    %461 = vmatprep.mubr.f32.mxu0 %v265
    %462 = vmatmul.mubr.f32.gmra.mrb[0].mxu0 %v233
    %v463 = vpop.f32.mrb[0].mxu0
    %v464 = vadd.f32 0.0, %v463
    %v465 = vpop.f32.mrb[0].mxu0
    %466 = vmatprep.mubr.f32.mxu0 %v266
    %467 = vmatmul.mubr.f32.gmra.mrb[0].mxu0 %v234
    %v468 = vpop.f32.mrb[0].mxu0
    %v469 = vadd.f32 0.0, %v468
    %v470 = vpop.f32.mrb[0].mxu0
    %471 = vmatprep.mubr.f32.mxu0 %v267
    %472 = vmatmul.mubr.f32.gmra.mrb[0].mxu0 %v235
    %v473 = vpop.f32.mrb[0].mxu0
    %v474 = vadd.f32 0.0, %v473
    %v475 = vpop.f32.mrb[0].mxu0
    %476 = vdwg.mxu0
    %477 = vmatprep.subr.mxu0 0.0
    %478 = vmatpush1.msra.mxu0 %v172
    %479 = vmatprep.subr.mxu0 0.0
    %480 = vmatpush1.msra.mxu0 %v173
    %481 = vmatprep.subr.mxu0 0.0
    %482 = vmatpush1.msra.mxu0 %v174
    %483 = vmatprep.subr.mxu0 0.0
    %484 = vmatpush1.msra.mxu0 %v175
    %485 = vmatprep.subr.mxu0 0.0
    %486 = vmatpush1.msra.mxu0 %v176
    %487 = vmatprep.subr.mxu0 0.0
    %488 = vmatpush1.msra.mxu0 %v177
    %489 = vmatprep.subr.mxu0 0.0
    %490 = vmatpush1.msra.mxu0 %v178
    %491 = vmatprep.subr.mxu0 0.0
    %492 = vmatpush1.msra.mxu0 %v179
    %493 = vmatprep.subr.mxu0 0.0
    %494 = vmatpush1.msra.mxu0 %v180
    %495 = vmatprep.subr.mxu0 0.0
    %496 = vmatpush1.msra.mxu0 %v181
    %497 = vmatprep.subr.mxu0 0.0
    %498 = vmatpush1.msra.mxu0 %v182
    %499 = vmatprep.subr.mxu0 0.0
    %500 = vmatpush1.msra.mxu0 %v183
    %501 = vmatprep.subr.mxu0 0.0
    %502 = vmatpush1.msra.mxu0 %v184
    %503 = vmatprep.subr.mxu0 0.0
    %504 = vmatpush1.msra.mxu0 %v185
    %505 = vmatprep.subr.mxu0 0.0
    %506 = vmatpush1.msra.mxu0 %v186
    %507 = vmatprep.subr.mxu0 0.0
    %508 = vmatpush1.msra.mxu0 %v187
    %509 = vmatprep.subr.mxu0 0.0
    %510 = vmatpush1.msra.mxu0 %v188
    %511 = vmatprep.subr.mxu0 0.0
    %512 = vmatpush1.msra.mxu0 %v189
    %513 = vmatprep.subr.mxu0 0.0
    %514 = vmatpush1.msra.mxu0 %v190
    %515 = vmatprep.subr.mxu0 0.0
    %516 = vmatpush1.msra.mxu0 %v191
    %517 = vmatprep.subr.mxu0 0.0
    %518 = vmatpush1.msra.mxu0 %v192
    %519 = vmatprep.subr.mxu0 0.0
    %520 = vmatpush1.msra.mxu0 %v193
    %521 = vmatprep.subr.mxu0 0.0
    %522 = vmatpush1.msra.mxu0 %v194
    %523 = vmatprep.subr.mxu0 0.0
    %524 = vmatpush1.msra.mxu0 %v195
    %525 = vmatprep.subr.mxu0 0.0
    %526 = vmatpush1.msra.mxu0 %v196
    %527 = vmatprep.subr.mxu0 0.0
    %528 = vmatpush1.msra.mxu0 %v197
    %529 = vmatprep.subr.mxu0 0.0
    %530 = vmatpush1.msra.mxu0 %v198
    %531 = vmatprep.subr.mxu0 0.0
    %532 = vmatpush1.msra.mxu0 %v199
    %533 = vmatprep.subr.mxu0 0.0
    %534 = vmatpush1.msra.mxu0 %v200
    %535 = vmatprep.subr.mxu0 0.0
    %536 = vmatpush1.msra.mxu0 %v201
    %537 = vmatprep.subr.mxu0 0.0
    %538 = vmatpush1.msra.mxu0 %v202
    %539 = vmatprep.subr.mxu0 0.0
    %540 = vmatpush1.msra.mxu0 %v203
    %541 = vmatprep.mubr.f32.mxu0 %v316
    %542 = vmatmul.mubr.f32.gmra.mrb[0].mxu0 %v284
    %v543 = vpop.f32.mrb[0].mxu0
    %v544 = vadd.f32 %v399, %v543
    %v545 = vpop.f32.mrb[0].mxu0
    %546 = vmatprep.mubr.f32.mxu0 %v317
    %547 = vmatmul.mubr.f32.gmra.mrb[0].mxu0 %v285
    %v548 = vpop.f32.mrb[0].mxu0
    %v549 = vadd.f32 %v404, %v548
    %v550 = vpop.f32.mrb[0].mxu0
    %551 = vmatprep.mubr.f32.mxu0 %v318
    %552 = vmatmul.mubr.f32.gmra.mrb[0].mxu0 %v286
    %v553 = vpop.f32.mrb[0].mxu0
    %v554 = vadd.f32 %v409, %v553
    %v555 = vpop.f32.mrb[0].mxu0
    %556 = vmatprep.mubr.f32.mxu0 %v319
    %557 = vmatmul.mubr.f32.gmra.mrb[0].mxu0 %v287
    %v558 = vpop.f32.mrb[0].mxu0
    %v559 = vadd.f32 %v414, %v558
    %v560 = vpop.f32.mrb[0].mxu0
    %561 = vmatprep.mubr.f32.mxu0 %v320
    %562 = vmatmul.mubr.f32.gmra.mrb[0].mxu0 %v288
    %v563 = vpop.f32.mrb[0].mxu0
    %v564 = vadd.f32 %v419, %v563
    %v565 = vpop.f32.mrb[0].mxu0
    %566 = vmatprep.mubr.f32.mxu0 %v321
    %567 = vmatmul.mubr.f32.gmra.mrb[0].mxu0 %v289
    %v568 = vpop.f32.mrb[0].mxu0
    %v569 = vadd.f32 %v424, %v568
    %v570 = vpop.f32.mrb[0].mxu0
    %571 = vmatprep.mubr.f32.mxu0 %v322
    %572 = vmatmul.mubr.f32.gmra.mrb[0].mxu0 %v290
    %v573 = vpop.f32.mrb[0].mxu0
    %v574 = vadd.f32 %v429, %v573
    %v575 = vpop.f32.mrb[0].mxu0
    %576 = vmatprep.mubr.f32.mxu0 %v323
    %577 = vmatmul.mubr.f32.gmra.mrb[0].mxu0 %v291
    %v578 = vpop.f32.mrb[0].mxu0
    %v579 = vadd.f32 %v434, %v578
    %v580 = vpop.f32.mrb[0].mxu0
    %581 = vmatprep.mubr.f32.mxu0 %v324
    %582 = vmatmul.mubr.f32.gmra.mrb[0].mxu0 %v292
    %v583 = vpop.f32.mrb[0].mxu0
    %v584 = vadd.f32 %v439, %v583
    %v585 = vpop.f32.mrb[0].mxu0
    %586 = vmatprep.mubr.f32.mxu0 %v325
    %587 = vmatmul.mubr.f32.gmra.mrb[0].mxu0 %v293
    %v588 = vpop.f32.mrb[0].mxu0
    %v589 = vadd.f32 %v444, %v588
    %v590 = vpop.f32.mrb[0].mxu0
    %591 = vmatprep.mubr.f32.mxu0 %v326
    %592 = vmatmul.mubr.f32.gmra.mrb[0].mxu0 %v294
    %v593 = vpop.f32.mrb[0].mxu0
    %v594 = vadd.f32 %v449, %v593
    %v595 = vpop.f32.mrb[0].mxu0
    %596 = vmatprep.mubr.f32.mxu0 %v327
    %597 = vmatmul.mubr.f32.gmra.mrb[0].mxu0 %v295
    %v598 = vpop.f32.mrb[0].mxu0
    %v599 = vadd.f32 %v454, %v598
    %v600 = vpop.f32.mrb[0].mxu0
    %601 = vmatprep.mubr.f32.mxu0 %v328
    %602 = vmatmul.mubr.f32.gmra.mrb[0].mxu0 %v296
    %v603 = vpop.f32.mrb[0].mxu0
    %v604 = vadd.f32 %v459, %v603
    %v605 = vpop.f32.mrb[0].mxu0
    %606 = vmatprep.mubr.f32.mxu0 %v329
    %607 = vmatmul.mubr.f32.gmra.mrb[0].mxu0 %v297
    %v608 = vpop.f32.mrb[0].mxu0
    %v609 = vadd.f32 %v464, %v608
    %v610 = vpop.f32.mrb[0].mxu0
    %611 = vmatprep.mubr.f32.mxu0 %v330
    %612 = vmatmul.mubr.f32.gmra.mrb[0].mxu0 %v298
    %v613 = vpop.f32.mrb[0].mxu0
    %v614 = vadd.f32 %v469, %v613
    %v615 = vpop.f32.mrb[0].mxu0
    %616 = vmatprep.mubr.f32.mxu0 %v331
    %617 = vmatmul.mubr.f32.gmra.mrb[0].mxu0 %v299
    %v618 = vpop.f32.mrb[0].mxu0
    %v619 = vadd.f32 %v474, %v618
    %v620 = vpop.f32.mrb[0].mxu0
    %621 = vdwg.mxu0
    %v622 = vadd.f32 %v60, %v544
    %v623 = vadd.f32 %v61, %v549
    %v624 = vadd.f32 %v62, %v554
    %v625 = vadd.f32 %v63, %v559
    %v626 = vadd.f32 %v64, %v564
    %v627 = vadd.f32 %v65, %v569
    %v628 = vadd.f32 %v66, %v574
    %v629 = vadd.f32 %v67, %v579
    %v630 = vadd.f32 %v68, %v584
    %v631 = vadd.f32 %v69, %v589
    %v632 = vadd.f32 %v70, %v594
    %v633 = vadd.f32 %v71, %v599
    %v634 = vadd.f32 %v72, %v604
    %v635 = vadd.f32 %v73, %v609
    %v636 = vadd.f32 %v74, %v614
    %v637 = vadd.f32 %v75, %v619
    %638 = vst [vmem:[#allocation7] sm:$0xff] %v622
    %639 = vst [vmem:[#allocation7 + $0x8] sm:$0xff] %v623
    %640 = vst [vmem:[#allocation7 + $0x10] sm:$0xff] %v624
    %641 = vst [vmem:[#allocation7 + $0x18] sm:$0xff] %v625
    %642 = vst [vmem:[#allocation7 + $0x20] sm:$0xff] %v626
    %643 = vst [vmem:[#allocation7 + $0x28] sm:$0xff] %v627
    %644 = vst [vmem:[#allocation7 + $0x30] sm:$0xff] %v628
    %645 = vst [vmem:[#allocation7 + $0x38] sm:$0xff] %v629
    %646 = vst [vmem:[#allocation7 + $0x40] sm:$0xff] %v630
    %647 = vst [vmem:[#allocation7 + $0x48] sm:$0xff] %v631
    %648 = vst [vmem:[#allocation7 + $0x50] sm:$0xff] %v632
    %649 = vst [vmem:[#allocation7 + $0x58] sm:$0xff] %v633
    %650 = vst [vmem:[#allocation7 + $0x60] sm:$0xff] %v634
    %651 = vst [vmem:[#allocation7 + $0x68] sm:$0xff] %v635
    %652 = vst [vmem:[#allocation7 + $0x70] sm:$0xff] %v636
    %653 = vst [vmem:[#allocation7 + $0x78] sm:$0xff] %v637
    // Predicated region
    $region22: #{tpu_custom_call.1} parent=1 // pred_check
      _
    $region23: #{tpu_custom_call.1} parent=1 // pred_check_branch
      %655 = sbr.rel (0) target = $region25
    $region24: #{tpu_custom_call.1} parent=1 // pred_region
      %s657 = ssub.s32 2048, 2048
      %658 = vsyncadd [#allocation4], %s657
      %s659 = sshll.u32 [#allocation7], 4
      %s660 = int_to_ptr.vmem [resolvable:$true] %s659
      %665 = dma.vmem_to_hbm [thread:$0]  %s660, 2048, %s2, [#allocation4], 128, 128, 8
    $region25: #{tpu_custom_call.1} parent=1 // pred_fallthru
      _
    // Predicated region
    $region26: #{tpu_custom_call.1} parent=1 // pred_check
      _
    $region27: #{tpu_custom_call.1} parent=1 // pred_check_branch
      %667 = sbr.rel (0) target = $region29
    $region28: #{tpu_custom_call.1} parent=1 // pred_region
      %668 = dma.done [#allocation4], 2048
    $region29: #{tpu_custom_call.1} parent=1 // pred_fallthru
      _
    %669 = vsyncpa [#allocation3], 1
    %670 = vsyncpa [#allocation6], 1
    %671 = vsyncpa [#allocation4], 1

</llo_original>
